<compile_context>
chip_gen: v7x
topology: tpu7x:2x2x1
jax: 0.10.0
libtpu: 0.0.40
codegen_flags: <defaults>
</compile_context>

<pallas_src>
import jax
import jax.numpy as jnp
from jax.experimental import pallas as pl
from jax.experimental.pallas import tpu as pltpu

OBS_DIM = 32
HIDDEN = 64
ACT_DIM = 8

# Row tile (MXU "M" dimension). Per row only ~96-160 B stream HBM<->VMEM vs
# ~13 KFLOP of matmul, so the kernel is memory/step-overhead bound: use the
# fewest, largest grid steps that fit VMEM. 8192 rows ~= 0.8-1.3 MB per step
# of DMA (~0.6-1 us) against the ~0.35 us fixed per-step overhead.
TILE_ROWS = 8192


def _round_up(x, m):
    return ((x + m - 1) // m) * m


def _policy_mlp_kernel(x_ref, w1_ref, b1_ref, w2_ref, b2_ref, w3_ref, b3_ref,
                       o_ref):
    """Fused 3-layer MLP policy on one row tile: (ReLU, ReLU, tanh).

    x_ref : (tile, OBS_DIM) activation tile in the compute dtype (bf16 or f32).
    w*    : full (tiny) weight blocks in the compute dtype; constant block
            index keeps them VMEM-resident across grid steps.
    b*    : f32 biases (applied on the f32 accumulator).
    o_ref : (tile, ACT_DIM) output tile.
    """
    cdt = x_ref.dtype  # compute dtype fed to the MXU (bf16 or f32)

    x = x_ref[...]
    # Biases read once (hoisted; keep hoisted if an inner loop is ever added --
    # JAX does not CSE broadcast_in_dim).
    b1 = b1_ref[...]
    b2 = b2_ref[...]
    b3 = b3_ref[...]

    h1 = jnp.dot(x, w1_ref[...], preferred_element_type=jnp.float32)
    h1 = jnp.maximum(h1 + b1, 0.0).astype(cdt)

    h2 = jnp.dot(h1, w2_ref[...], preferred_element_type=jnp.float32)
    h2 = jnp.maximum(h2 + b2, 0.0).astype(cdt)

    a = jnp.dot(h2, w3_ref[...], preferred_element_type=jnp.float32)
    a = jnp.tanh(a + b3)

    # TODO(synk): lane-dense output packing ((tile,8)->(tile//16,128) before the
    # bias+tanh) would densify the EUP/store path, but the required
    # sublane->lane reshape is not reliably lowered by Mosaic, so the (tile,8)
    # store (masked lanes) is kept; output is only ~20% of HBM traffic here.
    o_ref[...] = a.astype(o_ref.dtype)


def _choose_tile(n):
    """Fewest grid steps that fit VMEM, but >= 2 steps for large batches so the
    'parallel' grid axis can be sharded across both TensorCores on v7x."""
    if n <= 256:
        return _round_up(n, 16)  # sublane packing (f32: 8, bf16: 16)
    half = _round_up(-(-n // 2), 256)
    return min(TILE_ROWS, half)


def _vmem_limit_bytes(tile, in_itemsize, out_itemsize):
    """Scoped-VMEM budget for one grid step.

    Every <=128-wide minor dim is lane-padded to 128 in VMEM layout, so:
      2 x (x tile + out tile)  (double-buffered streaming blocks)
    + h1 + h2 + pre-tanh       (f32 intermediates)
    + slack for weights / spills / compiler scratch.
    Capped at 48 MiB so v7x (64 MiB physical per TC) keeps headroom.
    """
    lane = 128
    dbl_io = 2 * tile * lane * (in_itemsize + out_itemsize)
    interm = 3 * tile * lane * 4
    slack = 8 << 20
    return int(min(max(dbl_io + interm + slack, 16 << 20), 48 << 20))


def policy_forward(x2d, params):
    """Tiled, pipelined policy MLP on a flattened (N, obs_dim) batch."""
    w1, b1, w2, b2, w3, b3 = params
    n, obs_dim = x2d.shape

    out_dtype = x2d.dtype
    # bf16 inputs: feed the MXU bf16 directly (f32 accumulation). f32 inputs:
    # exact f32 path (matches PyTorch semantics numerically).
    compute_dtype = jnp.bfloat16 if x2d.dtype == jnp.bfloat16 else jnp.float32

    x = x2d if x2d.dtype == compute_dtype else x2d.astype(compute_dtype)
    w1c = w1.astype(compute_dtype)
    w2c = w2.astype(compute_dtype)
    w3c = w3.astype(compute_dtype)
    b1f = b1.astype(jnp.float32)
    b2f = b2.astype(jnp.float32)
    b3f = b3.astype(jnp.float32)

    tile = _choose_tile(n)
    grid = (pl.cdiv(n, tile),)  # partial last block handled (masked) by Pallas

    def const(shape):
        return pl.BlockSpec(shape, lambda i: (0,) * len(shape))

    in_itemsize = jnp.dtype(compute_dtype).itemsize
    out_itemsize = jnp.dtype(out_dtype).itemsize
    w_bytes = sum(int(a.size) * jnp.dtype(a.dtype).itemsize
                  for a in (w1c, b1f, w2c, b2f, w3c, b3f))
    cost = pl.CostEstimate(
        flops=2 * n * (obs_dim * HIDDEN + HIDDEN * HIDDEN + HIDDEN * ACT_DIM),
        transcendentals=n * ACT_DIM,
        bytes_accessed=n * obs_dim * in_itemsize
        + n * ACT_DIM * out_itemsize + w_bytes,
    )

    out = pl.pallas_call(
        _policy_mlp_kernel,
        out_shape=jax.ShapeDtypeStruct((n, ACT_DIM), out_dtype),
        grid=grid,
        in_specs=[
            # Activation tile streams through the grid (double-buffered DMA).
            pl.BlockSpec((tile, obs_dim), lambda i: (i, 0)),
            # Weights/biases: constant block index -> resident, no re-DMA.
            const(w1c.shape), const(b1f.shape),
            const(w2c.shape), const(b2f.shape),
            const(w3c.shape), const(b3f.shape),
        ],
        out_specs=pl.BlockSpec((tile, ACT_DIM), lambda i: (i, 0)),
        compiler_params=pltpu.CompilerParams(
            # Batch axis is embarrassingly parallel -> dual-TC on v7x.
            dimension_semantics=("parallel",),
            vmem_limit_bytes=_vmem_limit_bytes(tile, in_itemsize, out_itemsize),
        ),
        cost_estimate=cost,
    )(x, w1c, b1f, w2c, b2f, w3c, b3f)

    return out


def mymodel_forward(inp, params):
    """Mirror of mymodel.forward: flatten >2-D inputs, run policy, reshape."""
    # TODO(synk): A2C/PPO branch (`action, _, _ = self.model(x)`) not implemented;
    # the plain SB3 MLP-policy branch is assumed.
    if inp.ndim > 2:
        x = inp.reshape(-1, inp.shape[-1])
    else:
        x = inp
    action = policy_forward(x, params)
    if inp.ndim > 2:
        return action.reshape(inp.shape[0], inp.shape[1], action.shape[-1])
    return action


def init_params(key):
    """Deterministic synthetic policy parameters (no checkpoint load)."""
    k1, k2, k3 = jax.random.split(key, 3)
    scale1 = 1.0 / jnp.sqrt(OBS_DIM)
    scale2 = 1.0 / jnp.sqrt(HIDDEN)
    w1 = jax.random.uniform(k1, (OBS_DIM, HIDDEN), jnp.float32, -scale1, scale1)
    b1 = jnp.zeros((1, HIDDEN), jnp.float32)
    w2 = jax.random.uniform(k2, (HIDDEN, HIDDEN), jnp.float32, -scale2, scale2)
    b2 = jnp.zeros((1, HIDDEN), jnp.float32)
    w3 = jax.random.uniform(k3, (HIDDEN, ACT_DIM), jnp.float32, -scale2, scale2)
    b3 = jnp.zeros((1, ACT_DIM), jnp.float32)
    return (w1, b1, w2, b2, w3, b3)


if __name__ == "__main__":
    key = jax.random.PRNGKey(0)
    pkey, xkey = jax.random.split(key)
    params = init_params(pkey)
    w1, b1, w2, b2, w3, b3 = params

    def ref_forward(x):
        xf = x.reshape(-1, x.shape[-1]).astype(jnp.float32)
        h = jnp.maximum(xf @ w1 + b1, 0.0)
        h = jnp.maximum(h @ w2 + b2, 0.0)
        a = jnp.tanh(h @ w3 + b3)
        if x.ndim > 2:
            return a.reshape(x.shape[0], x.shape[1], ACT_DIM)
        return a

    # 1) Small episodic batch (B=2, T=8), f32 I/O -- matches PyTorch semantics.
    x_small = jax.random.normal(xkey, (2, 8, OBS_DIM), jnp.float32)
    out_small = jax.block_until_ready(mymodel_forward(x_small, params))
    assert out_small.shape == (2, 8, ACT_DIM)
    assert jnp.allclose(out_small, ref_forward(x_small), atol=1e-4, rtol=1e-4)

    # 2) Already-flat 2-D input (exercises the ndim == 2 branch).
    x_flat = jax.random.normal(jax.random.PRNGKey(2), (16, OBS_DIM), jnp.float32)
    out_flat = jax.block_until_ready(mymodel_forward(x_flat, params))
    assert out_flat.shape == (16, ACT_DIM)
    assert jnp.allclose(out_flat, ref_forward(x_flat), atol=1e-4, rtol=1e-4)

    # 3) Larger ragged batch: multi-step grid with a masked partial last block
    #    (no wrapper-side padding / slicing copies).
    x_big = jax.random.normal(jax.random.PRNGKey(1), (4, 300, OBS_DIM),
                              jnp.float32)
    out_big = jax.block_until_ready(mymodel_forward(x_big, params))
    assert out_big.shape == (4, 300, ACT_DIM)
    assert jnp.allclose(out_big, ref_forward(x_big), atol=1e-4, rtol=1e-4)

    # 4) bf16 HBM I/O + bf16-fed MXU (f32 accumulation); halves streaming bytes.
    x_bf16 = x_big.astype(jnp.bfloat16)
    out_bf16 = jax.block_until_ready(mymodel_forward(x_bf16, params))
    assert out_bf16.dtype == jnp.bfloat16
    ref_bf16 = ref_forward(x_bf16.astype(jnp.float32))
    assert jnp.allclose(out_bf16.astype(jnp.float32), ref_bf16,
                        atol=5e-2, rtol=5e-2)

    print("KERNEL_OK")
</pallas_src>

<mosaic_0001>
module attributes {stable_mosaic.version = 11 : i64} {
  func.func @_policy_mlp_kernel(%arg0: i32, %arg1: memref<16x32xf32, #tpu.memory_space<vmem>>, %arg2: memref<32x64xf32, #tpu.memory_space<vmem>>, %arg3: memref<1x64xf32, #tpu.memory_space<vmem>>, %arg4: memref<64x64xf32, #tpu.memory_space<vmem>>, %arg5: memref<1x64xf32, #tpu.memory_space<vmem>>, %arg6: memref<64x8xf32, #tpu.memory_space<vmem>>, %arg7: memref<1x8xf32, #tpu.memory_space<vmem>>, %arg8: memref<16x8xf32, #tpu.memory_space<vmem>>) attributes {dimension_semantics = [#tpu.dimension_semantics<parallel>], iteration_bounds = array<i64: 1>, scalar_prefetch = 0 : i64, scratch_operands = 0 : i64, tpu.core_type = #tpu.core_type<tc>, window_params = [{transform_indices = @transform_0, window_bounds = array<i64: 16, 32>}, {pipeline_mode = #tpu.pipeline_mode<synchronous>, transform_indices = @transform_1, window_bounds = array<i64: 32, 64>}, {pipeline_mode = #tpu.pipeline_mode<synchronous>, transform_indices = @transform_2, window_bounds = array<i64: 1, 64>}, {pipeline_mode = #tpu.pipeline_mode<synchronous>, transform_indices = @transform_3, window_bounds = array<i64: 64, 64>}, {pipeline_mode = #tpu.pipeline_mode<synchronous>, transform_indices = @transform_4, window_bounds = array<i64: 1, 64>}, {pipeline_mode = #tpu.pipeline_mode<synchronous>, transform_indices = @transform_5, window_bounds = array<i64: 64, 8>}, {pipeline_mode = #tpu.pipeline_mode<synchronous>, transform_indices = @transform_6, window_bounds = array<i64: 1, 8>}, {transform_indices = @transform_7, window_bounds = array<i64: 16, 8>}]} {
    %c0 = arith.constant 0 : index
    %c0_0 = arith.constant 0 : index
    %0 = vector.load %arg1[%c0, %c0_0] : memref<16x32xf32, #tpu.memory_space<vmem>>, vector<16x32xf32>
    %c0_1 = arith.constant 0 : index
    %c0_2 = arith.constant 0 : index
    %1 = vector.load %arg3[%c0_1, %c0_2] : memref<1x64xf32, #tpu.memory_space<vmem>>, vector<1x64xf32>
    %c0_3 = arith.constant 0 : index
    %c0_4 = arith.constant 0 : index
    %2 = vector.load %arg5[%c0_3, %c0_4] : memref<1x64xf32, #tpu.memory_space<vmem>>, vector<1x64xf32>
    %c0_5 = arith.constant 0 : index
    %c0_6 = arith.constant 0 : index
    %3 = vector.load %arg7[%c0_5, %c0_6] : memref<1x8xf32, #tpu.memory_space<vmem>>, vector<1x8xf32>
    %c0_7 = arith.constant 0 : index
    %c0_8 = arith.constant 0 : index
    %4 = vector.load %arg2[%c0_7, %c0_8] : memref<32x64xf32, #tpu.memory_space<vmem>>, vector<32x64xf32>
    %cst = arith.constant dense<0.000000e+00> : vector<16x64xf32>
    %5 = tpu.matmul %0, %4, %cst {dimension_numbers = #tpu.dot_dimension_numbers<[1], [0], [0], [1], [0, 0, 1, 1], [], []>} : vector<16x32xf32>, vector<32x64xf32>, vector<16x64xf32> -> vector<16x64xf32>
    %6 = vector.broadcast %1 : vector<1x64xf32> to vector<16x64xf32>
    %7 = arith.addf %5, %6 : vector<16x64xf32>
    %cst_9 = arith.constant 0.000000e+00 : f32
    %8 = vector.broadcast %cst_9 : f32 to vector<16x64xf32>
    %9 = arith.maximumf %7, %8 : vector<16x64xf32>
    %c0_10 = arith.constant 0 : index
    %c0_11 = arith.constant 0 : index
    %10 = vector.load %arg4[%c0_10, %c0_11] : memref<64x64xf32, #tpu.memory_space<vmem>>, vector<64x64xf32>
    %cst_12 = arith.constant dense<0.000000e+00> : vector<16x64xf32>
    %11 = tpu.matmul %9, %10, %cst_12 {dimension_numbers = #tpu.dot_dimension_numbers<[1], [0], [0], [1], [0, 0, 1, 1], [], []>} : vector<16x64xf32>, vector<64x64xf32>, vector<16x64xf32> -> vector<16x64xf32>
    %12 = vector.broadcast %2 : vector<1x64xf32> to vector<16x64xf32>
    %13 = arith.addf %11, %12 : vector<16x64xf32>
    %cst_13 = arith.constant 0.000000e+00 : f32
    %14 = vector.broadcast %cst_13 : f32 to vector<16x64xf32>
    %15 = arith.maximumf %13, %14 : vector<16x64xf32>
    %c0_14 = arith.constant 0 : index
    %c0_15 = arith.constant 0 : index
    %16 = vector.load %arg6[%c0_14, %c0_15] : memref<64x8xf32, #tpu.memory_space<vmem>>, vector<64x8xf32>
    %cst_16 = arith.constant dense<0.000000e+00> : vector<16x8xf32>
    %17 = tpu.matmul %15, %16, %cst_16 {dimension_numbers = #tpu.dot_dimension_numbers<[1], [0], [0], [1], [0, 0, 1, 1], [], []>} : vector<16x64xf32>, vector<64x8xf32>, vector<16x8xf32> -> vector<16x8xf32>
    %18 = vector.broadcast %3 : vector<1x8xf32> to vector<16x8xf32>
    %19 = arith.addf %17, %18 : vector<16x8xf32>
    %20 = math.tanh %19 : vector<16x8xf32>
    %c0_17 = arith.constant 0 : index
    %c0_18 = arith.constant 0 : index
    %21 = vector.load %arg8[%c0_17, %c0_18] : memref<16x8xf32, #tpu.memory_space<vmem>>, vector<16x8xf32>
    tpu.vector_store %arg8[%c0_17, %c0_18], %20 {strides = array<i32>} : memref<16x8xf32, #tpu.memory_space<vmem>>, vector<16x8xf32>,
    return
  }
  func.func @transform_0(%arg0: i32) -> (i32, i32) {
    %c0_i32 = arith.constant 0 : i32
    %c0_i32_0 = arith.constant 0 : i32
    return %arg0, %c0_i32 : i32, i32
  }
  func.func @transform_1(%arg0: i32) -> (i32, i32) {
    %c0_i32 = arith.constant 0 : i32
    %c0_i32_0 = arith.constant 0 : i32
    %c0_i32_1 = arith.constant 0 : i32
    return %c0_i32, %c0_i32_0 : i32, i32
  }
  func.func @transform_2(%arg0: i32) -> (i32, i32) {
    %c0_i32 = arith.constant 0 : i32
    %c0_i32_0 = arith.constant 0 : i32
    %c0_i32_1 = arith.constant 0 : i32
    return %c0_i32, %c0_i32_0 : i32, i32
  }
  func.func @transform_3(%arg0: i32) -> (i32, i32) {
    %c0_i32 = arith.constant 0 : i32
    %c0_i32_0 = arith.constant 0 : i32
    %c0_i32_1 = arith.constant 0 : i32
    return %c0_i32, %c0_i32_0 : i32, i32
  }
  func.func @transform_4(%arg0: i32) -> (i32, i32) {
    %c0_i32 = arith.constant 0 : i32
    %c0_i32_0 = arith.constant 0 : i32
    %c0_i32_1 = arith.constant 0 : i32
    return %c0_i32, %c0_i32_0 : i32, i32
  }
  func.func @transform_5(%arg0: i32) -> (i32, i32) {
    %c0_i32 = arith.constant 0 : i32
    %c0_i32_0 = arith.constant 0 : i32
    %c0_i32_1 = arith.constant 0 : i32
    return %c0_i32, %c0_i32_0 : i32, i32
  }
  func.func @transform_6(%arg0: i32) -> (i32, i32) {
    %c0_i32 = arith.constant 0 : i32
    %c0_i32_0 = arith.constant 0 : i32
    %c0_i32_1 = arith.constant 0 : i32
    return %c0_i32, %c0_i32_0 : i32, i32
  }
  func.func @transform_7(%arg0: i32) -> (i32, i32) {
    %c0_i32 = arith.constant 0 : i32
    %c0_i32_0 = arith.constant 0 : i32
    return %arg0, %c0_i32 : i32, i32
  }
}

</mosaic_0001>

<llo_original>
// kernel: tpu_custom_call.1
$region0: #{tpu_custom_call.1}
  #allocation0 [shape = 'u32[]', space=smem, size = 0x4, offset = 0x4, fixed_abs, tag = 'smem constant byte address 0x4 - core index']
  #allocation1 [shape = 'u32[144,128]{1,0:T(1,128)}', space=vmem, size = 0x12000, scoped, tag = 'internal scratch']
  %s0 = inlined_call_operand.vmem [shape: f32[16,32], index: 0, kind: input, shape index: {}]
  %s1 = inlined_call_operand.hbm [shape: f32[32,64], index: 1, kind: input, shape index: {}]
  %s2 = inlined_call_operand.vmem [shape: f32[1,64], index: 2, kind: input, shape index: {}]
  %s3 = inlined_call_operand.vmem [shape: f32[64,64], index: 3, kind: input, shape index: {}]
  %s4 = inlined_call_operand.vmem [shape: f32[1,64], index: 4, kind: input, shape index: {}]
  %s5 = inlined_call_operand.vmem [shape: f32[64,8], index: 5, kind: input, shape index: {}]
  %s6 = inlined_call_operand.vmem [shape: f32[1,8], index: 6, kind: input, shape index: {}]
  %s7 = inlined_call_operand.vmem [shape: f32[16,8], index: 7, kind: output, shape index: {}]
  %s8 = sld [smem:[#allocation0]]
  $region42: #{tpu_custom_call.1} parent=0
    _
  %s10 = ssub.s32 1, %s8
  %s11 = scalar_select 0, %s10, %s8
  $region1: #{tpu_custom_call.1} parent=0
    #allocation2 [shape = 'u8[16384]{0}', space=vmem, size = 0x4000, scoped, tag = 'input window, operand 1, single buffered']
    #allocation3 [shape = 's32[1]{0}', space=sflag, size = 0x4, scoped, tag = 'scoped memory for tpu_custom_call.1']
    %12 = vsyncpa [#allocation3], 0
    // Predicated region
    $region2: #{tpu_custom_call.1} parent=1 // pred_check
      _
    $region3: #{tpu_custom_call.1} parent=1 // pred_check_branch
      %14 = sbr.rel (0) target = $region5
    $region4: #{tpu_custom_call.1} parent=1 // pred_region
      _
    $region5: #{tpu_custom_call.1} parent=1 // pred_fallthru
      _
    // Predicated region
    $region6: #{tpu_custom_call.1} parent=1 // pred_check
      _
    $region7: #{tpu_custom_call.1} parent=1 // pred_check_branch
      %16 = sbr.rel (0) target = $region9
    $region8: #{tpu_custom_call.1} parent=1 // pred_region
      %s18 = ssub.s32 512, 512
      %19 = vsyncadd [#allocation3], %s18
      %s20 = sshll.u32 [#allocation2], 4
      %s21 = int_to_ptr.vmem [resolvable:$true] %s20
      %26 = dma.hbm_to_vmem [thread:$0]  %s1, 512, %s21, [#allocation3], 128, 128, 8
    $region9: #{tpu_custom_call.1} parent=1 // pred_fallthru
      _
    // Predicated region
    $region10: #{tpu_custom_call.1} parent=1 // pred_check
      _
    $region11: #{tpu_custom_call.1} parent=1 // pred_check_branch
      %28 = sbr.rel (0) target = $region13
    $region12: #{tpu_custom_call.1} parent=1 // pred_region
      _
    $region13: #{tpu_custom_call.1} parent=1 // pred_fallthru
      _
    // Predicated region
    $region14: #{tpu_custom_call.1} parent=1 // pred_check
      _
    $region15: #{tpu_custom_call.1} parent=1 // pred_check_branch
      %30 = sbr.rel (0) target = $region17
    $region16: #{tpu_custom_call.1} parent=1 // pred_region
      _
    $region17: #{tpu_custom_call.1} parent=1 // pred_fallthru
      _
    // Predicated region
    $region18: #{tpu_custom_call.1} parent=1 // pred_check
      _
    $region19: #{tpu_custom_call.1} parent=1 // pred_check_branch
      %32 = sbr.rel (0) target = $region21
    $region20: #{tpu_custom_call.1} parent=1 // pred_region
      _
    $region21: #{tpu_custom_call.1} parent=1 // pred_fallthru
      _
    // Predicated region
    $region22: #{tpu_custom_call.1} parent=1 // pred_check
      _
    $region23: #{tpu_custom_call.1} parent=1 // pred_check_branch
      %34 = sbr.rel (0) target = $region25
    $region24: #{tpu_custom_call.1} parent=1 // pred_region
      _
    $region25: #{tpu_custom_call.1} parent=1 // pred_fallthru
      _
    // Predicated region
    $region26: #{tpu_custom_call.1} parent=1 // pred_check
      _
    $region27: #{tpu_custom_call.1} parent=1 // pred_check_branch
      %36 = sbr.rel (0) target = $region29
    $region28: #{tpu_custom_call.1} parent=1 // pred_region
      _
    $region29: #{tpu_custom_call.1} parent=1 // pred_fallthru
      _
    // Predicated region
    $region30: #{tpu_custom_call.1} parent=1 // pred_check
      _
    $region31: #{tpu_custom_call.1} parent=1 // pred_check_branch
      %38 = sbr.rel (0) target = $region33
    $region32: #{tpu_custom_call.1} parent=1 // pred_region
      %39 = dma.done [#allocation3], 512
    $region33: #{tpu_custom_call.1} parent=1 // pred_fallthru
      _
    %v40 = vld [vmem:[%s0] sm:$0xff]
    %v41 = vld [vmem:[%s0 + $0x8] sm:$0xff]
    %v42 = vld [vmem:[%s2] sm:$0x1]
    %v43 = vld [vmem:[%s4] sm:$0x1]
    %v44 = vld [vmem:[%s6] sm:$0x1]
    %v45 = vld [vmem:[#allocation2] sm:$0xff]
    %v46 = vld [vmem:[#allocation2 + $0x8] sm:$0xff]
    %v47 = vld [vmem:[#allocation2 + $0x10] sm:$0xff]
    %v48 = vld [vmem:[#allocation2 + $0x18] sm:$0xff]
    %v50 = vlaneseq
    %v51 = vshrl.u32 %v50, 7
    %v52 = vsub.s32 0, %v51
    %v53 = vrot.slane %v42, %v52
    %vm55 = vcmask 261120
    %v57 = vsel %vm55, %v40, 0
    %v60 = vsel %vm55, %v41, 0
    %62 = vmatprep.subr.mxu0 0.0
    %63 = vmatpush1.msra.mxu0 %v45
    %64 = vmatprep.subr.mxu0 0.0
    %65 = vmatpush1.msra.mxu0 %v46
    %66 = vmatprep.subr.mxu0 0.0
    %67 = vmatpush1.msra.mxu0 %v47
    %68 = vmatprep.subr.mxu0 0.0
    %69 = vmatpush1.msra.mxu0 %v48
    %70 = vmatprep.subr.mxu0 0.0
    %71 = vmatpush1.msra.mxu0 0.0
    %72 = vmatprep.subr.mxu0 0.0
    %73 = vmatpush1.msra.mxu0 0.0
    %74 = vmatprep.subr.mxu0 0.0
    %75 = vmatpush1.msra.mxu0 0.0
    %76 = vmatprep.subr.mxu0 0.0
    %77 = vmatpush1.msra.mxu0 0.0
    %78 = vmatprep.subr.mxu0 0.0
    %79 = vmatpush1.msra.mxu0 0.0
    %80 = vmatprep.subr.mxu0 0.0
    %81 = vmatpush1.msra.mxu0 0.0
    %82 = vmatprep.subr.mxu0 0.0
    %83 = vmatpush1.msra.mxu0 0.0
    %84 = vmatprep.subr.mxu0 0.0
    %85 = vmatpush1.msra.mxu0 0.0
    %86 = vmatprep.subr.mxu0 0.0
    %87 = vmatpush1.msra.mxu0 0.0
    %88 = vmatprep.subr.mxu0 0.0
    %89 = vmatpush1.msra.mxu0 0.0
    %90 = vmatprep.subr.mxu0 0.0
    %91 = vmatpush1.msra.mxu0 0.0
    %92 = vmatprep.subr.mxu0 0.0
    %93 = vmatpush1.msra.mxu0 0.0
    %94 = vmatprep.subr.mxu0 0.0
    %95 = vmatpush1.msra.mxu0 0.0
    %96 = vmatprep.subr.mxu0 0.0
    %97 = vmatpush1.msra.mxu0 0.0
    %98 = vmatprep.subr.mxu0 0.0
    %99 = vmatpush1.msra.mxu0 0.0
    %100 = vmatprep.subr.mxu0 0.0
    %101 = vmatpush1.msra.mxu0 0.0
    %102 = vmatprep.subr.mxu0 0.0
    %103 = vmatpush1.msra.mxu0 0.0
    %104 = vmatprep.subr.mxu0 0.0
    %105 = vmatpush1.msra.mxu0 0.0
    %106 = vmatprep.subr.mxu0 0.0
    %107 = vmatpush1.msra.mxu0 0.0
    %108 = vmatprep.subr.mxu0 0.0
    %109 = vmatpush1.msra.mxu0 0.0
    %110 = vmatprep.subr.mxu0 0.0
    %111 = vmatpush1.msra.mxu0 0.0
    %112 = vmatprep.subr.mxu0 0.0
    %113 = vmatpush1.msra.mxu0 0.0
    %114 = vmatprep.subr.mxu0 0.0
    %115 = vmatpush1.msra.mxu0 0.0
    %116 = vmatprep.subr.mxu0 0.0
    %117 = vmatpush1.msra.mxu0 0.0
    %118 = vmatprep.subr.mxu0 0.0
    %119 = vmatpush1.msra.mxu0 0.0
    %120 = vmatprep.subr.mxu0 0.0
    %121 = vmatpush1.msra.mxu0 0.0
    %122 = vmatprep.subr.mxu0 0.0
    %123 = vmatpush1.msra.mxu0 0.0
    %124 = vmatprep.subr.mxu0 0.0
    %125 = vmatpush1.msra.mxu0 0.0
    %126 = vmatprep.mubr.f32.mxu0 0.0
    %127 = vmatmul.mubr.f32.gmra.mrb[0].mxu0 %v57
    %v128 = vpop.f32.mrb[0].mxu0
    %v129 = vadd.f32 %v53, %v128
    %v130 = vpop.f32.mrb[0].mxu0
    %131 = vmatprep.mubr.f32.mxu0 0.0
    %132 = vmatmul.mubr.f32.gmra.mrb[0].mxu0 %v60
    %v133 = vpop.f32.mrb[0].mxu0
    %v134 = vadd.f32 %v53, %v133
    %v135 = vpop.f32.mrb[0].mxu0
    %136 = vdwg.mxu0
    %v137 = vmax.f32 %v129, 0.0
    %v138 = vmax.f32 %v134, 0.0
    %v139 = vld [vmem:[%s3] sm:$0xff]
    %v140 = vld [vmem:[%s3 + $0x8] sm:$0xff]
    %v141 = vld [vmem:[%s3 + $0x10] sm:$0xff]
    %v142 = vld [vmem:[%s3 + $0x18] sm:$0xff]
    %v143 = vld [vmem:[%s3 + $0x20] sm:$0xff]
    %v144 = vld [vmem:[%s3 + $0x28] sm:$0xff]
    %v145 = vld [vmem:[%s3 + $0x30] sm:$0xff]
    %v146 = vld [vmem:[%s3 + $0x38] sm:$0xff]
    %v148 = vlaneseq
    %v149 = vshrl.u32 %v148, 7
    %v150 = vsub.s32 0, %v149
    %v151 = vrot.slane %v43, %v150
    %vm153 = vcmask 523264
    %v155 = vsel %vm153, %v137, 0
    %v158 = vsel %vm153, %v138, 0
    %160 = vmatprep.subr.mxu0 0.0
    %161 = vmatpush1.msra.mxu0 %v139
    %162 = vmatprep.subr.mxu0 0.0
    %163 = vmatpush1.msra.mxu0 %v140
    %164 = vmatprep.subr.mxu0 0.0
    %165 = vmatpush1.msra.mxu0 %v141
    %166 = vmatprep.subr.mxu0 0.0
    %167 = vmatpush1.msra.mxu0 %v142
    %168 = vmatprep.subr.mxu0 0.0
    %169 = vmatpush1.msra.mxu0 %v143
    %170 = vmatprep.subr.mxu0 0.0
    %171 = vmatpush1.msra.mxu0 %v144
    %172 = vmatprep.subr.mxu0 0.0
    %173 = vmatpush1.msra.mxu0 %v145
    %174 = vmatprep.subr.mxu0 0.0
    %175 = vmatpush1.msra.mxu0 %v146
    %176 = vmatprep.subr.mxu0 0.0
    %177 = vmatpush1.msra.mxu0 0.0
    %178 = vmatprep.subr.mxu0 0.0
    %179 = vmatpush1.msra.mxu0 0.0
    %180 = vmatprep.subr.mxu0 0.0
    %181 = vmatpush1.msra.mxu0 0.0
    %182 = vmatprep.subr.mxu0 0.0
    %183 = vmatpush1.msra.mxu0 0.0
    %184 = vmatprep.subr.mxu0 0.0
    %185 = vmatpush1.msra.mxu0 0.0
    %186 = vmatprep.subr.mxu0 0.0
    %187 = vmatpush1.msra.mxu0 0.0
    %188 = vmatprep.subr.mxu0 0.0
    %189 = vmatpush1.msra.mxu0 0.0
    %190 = vmatprep.subr.mxu0 0.0
    %191 = vmatpush1.msra.mxu0 0.0
    %192 = vmatprep.subr.mxu0 0.0
    %193 = vmatpush1.msra.mxu0 0.0
    %194 = vmatprep.subr.mxu0 0.0
    %195 = vmatpush1.msra.mxu0 0.0
    %196 = vmatprep.subr.mxu0 0.0
    %197 = vmatpush1.msra.mxu0 0.0
    %198 = vmatprep.subr.mxu0 0.0
    %199 = vmatpush1.msra.mxu0 0.0
    %200 = vmatprep.subr.mxu0 0.0
    %201 = vmatpush1.msra.mxu0 0.0
    %202 = vmatprep.subr.mxu0 0.0
    %203 = vmatpush1.msra.mxu0 0.0
    %204 = vmatprep.subr.mxu0 0.0
    %205 = vmatpush1.msra.mxu0 0.0
    %206 = vmatprep.subr.mxu0 0.0
    %207 = vmatpush1.msra.mxu0 0.0
    %208 = vmatprep.subr.mxu0 0.0
    %209 = vmatpush1.msra.mxu0 0.0
    %210 = vmatprep.subr.mxu0 0.0
    %211 = vmatpush1.msra.mxu0 0.0
    %212 = vmatprep.subr.mxu0 0.0
    %213 = vmatpush1.msra.mxu0 0.0
    %214 = vmatprep.subr.mxu0 0.0
    %215 = vmatpush1.msra.mxu0 0.0
    %216 = vmatprep.subr.mxu0 0.0
    %217 = vmatpush1.msra.mxu0 0.0
    %218 = vmatprep.subr.mxu0 0.0
    %219 = vmatpush1.msra.mxu0 0.0
    %220 = vmatprep.subr.mxu0 0.0
    %221 = vmatpush1.msra.mxu0 0.0
    %222 = vmatprep.subr.mxu0 0.0
    %223 = vmatpush1.msra.mxu0 0.0
    %224 = vmatprep.mubr.f32.mxu0 0.0
    %225 = vmatmul.mubr.f32.gmra.mrb[0].mxu0 %v155
    %v226 = vpop.f32.mrb[0].mxu0
    %v227 = vadd.f32 %v151, %v226
    %v228 = vpop.f32.mrb[0].mxu0
    %229 = vmatprep.mubr.f32.mxu0 0.0
    %230 = vmatmul.mubr.f32.gmra.mrb[0].mxu0 %v158
    %v231 = vpop.f32.mrb[0].mxu0
    %v232 = vadd.f32 %v151, %v231
    %v233 = vpop.f32.mrb[0].mxu0
    %234 = vdwg.mxu0
    %v235 = vmax.f32 %v227, 0.0
    %v236 = vmax.f32 %v232, 0.0
    %v237 = vld [vmem:[%s5] sm:$0xff]
    %v238 = vld [vmem:[%s5 + $0x8] sm:$0xff]
    %v239 = vld [vmem:[%s5 + $0x10] sm:$0xff]
    %v240 = vld [vmem:[%s5 + $0x18] sm:$0xff]
    %v241 = vld [vmem:[%s5 + $0x20] sm:$0xff]
    %v242 = vld [vmem:[%s5 + $0x28] sm:$0xff]
    %v243 = vld [vmem:[%s5 + $0x30] sm:$0xff]
    %v244 = vld [vmem:[%s5 + $0x38] sm:$0xff]
    %v246 = vlaneseq
    %v247 = vshrl.u32 %v246, 7
    %v248 = vsub.s32 0, %v247
    %v249 = vrot.slane %v44, %v248
    %v252 = vsel %vm153, %v235, 0
    %v255 = vsel %vm153, %v236, 0
    %257 = vmatprep.subr.mxu0 0.0
    %258 = vmatpush1.msra.mxu0 %v237
    %259 = vmatprep.subr.mxu0 0.0
    %260 = vmatpush1.msra.mxu0 %v238
    %261 = vmatprep.subr.mxu0 0.0
    %262 = vmatpush1.msra.mxu0 %v239
    %263 = vmatprep.subr.mxu0 0.0
    %264 = vmatpush1.msra.mxu0 %v240
    %265 = vmatprep.subr.mxu0 0.0
    %266 = vmatpush1.msra.mxu0 %v241
    %267 = vmatprep.subr.mxu0 0.0
    %268 = vmatpush1.msra.mxu0 %v242
    %269 = vmatprep.subr.mxu0 0.0
    %270 = vmatpush1.msra.mxu0 %v243
    %271 = vmatprep.subr.mxu0 0.0
    %272 = vmatpush1.msra.mxu0 %v244
    %273 = vmatprep.subr.mxu0 0.0
    %274 = vmatpush1.msra.mxu0 0.0
    %275 = vmatprep.subr.mxu0 0.0
    %276 = vmatpush1.msra.mxu0 0.0
    %277 = vmatprep.subr.mxu0 0.0
    %278 = vmatpush1.msra.mxu0 0.0
    %279 = vmatprep.subr.mxu0 0.0
    %280 = vmatpush1.msra.mxu0 0.0
    %281 = vmatprep.subr.mxu0 0.0
    %282 = vmatpush1.msra.mxu0 0.0
    %283 = vmatprep.subr.mxu0 0.0
    %284 = vmatpush1.msra.mxu0 0.0
    %285 = vmatprep.subr.mxu0 0.0
    %286 = vmatpush1.msra.mxu0 0.0
    %287 = vmatprep.subr.mxu0 0.0
    %288 = vmatpush1.msra.mxu0 0.0
    %289 = vmatprep.subr.mxu0 0.0
    %290 = vmatpush1.msra.mxu0 0.0
    %291 = vmatprep.subr.mxu0 0.0
    %292 = vmatpush1.msra.mxu0 0.0
    %293 = vmatprep.subr.mxu0 0.0
    %294 = vmatpush1.msra.mxu0 0.0
    %295 = vmatprep.subr.mxu0 0.0
    %296 = vmatpush1.msra.mxu0 0.0
    %297 = vmatprep.subr.mxu0 0.0
    %298 = vmatpush1.msra.mxu0 0.0
    %299 = vmatprep.subr.mxu0 0.0
    %300 = vmatpush1.msra.mxu0 0.0
    %301 = vmatprep.subr.mxu0 0.0
    %302 = vmatpush1.msra.mxu0 0.0
    %303 = vmatprep.subr.mxu0 0.0
    %304 = vmatpush1.msra.mxu0 0.0
    %305 = vmatprep.subr.mxu0 0.0
    %306 = vmatpush1.msra.mxu0 0.0
    %307 = vmatprep.subr.mxu0 0.0
    %308 = vmatpush1.msra.mxu0 0.0
    %309 = vmatprep.subr.mxu0 0.0
    %310 = vmatpush1.msra.mxu0 0.0
    %311 = vmatprep.subr.mxu0 0.0
    %312 = vmatpush1.msra.mxu0 0.0
    %313 = vmatprep.subr.mxu0 0.0
    %314 = vmatpush1.msra.mxu0 0.0
    %315 = vmatprep.subr.mxu0 0.0
    %316 = vmatpush1.msra.mxu0 0.0
    %317 = vmatprep.subr.mxu0 0.0
    %318 = vmatpush1.msra.mxu0 0.0
    %319 = vmatprep.subr.mxu0 0.0
    %320 = vmatpush1.msra.mxu0 0.0
    %321 = vmatprep.mubr.f32.mxu0 0.0
    %322 = vmatmul.mubr.f32.gmra.mrb[0].mxu0 %v252
    %v323 = vpop.f32.mrb[0].mxu0
    %v324 = vadd.f32 %v249, %v323
    %v325 = vpop.f32.mrb[0].mxu0
    %326 = vmatprep.mubr.f32.mxu0 0.0
    %327 = vmatmul.mubr.f32.gmra.mrb[0].mxu0 %v255
    %v328 = vpop.f32.mrb[0].mxu0
    %v329 = vadd.f32 %v249, %v328
    %v330 = vpop.f32.mrb[0].mxu0
    %331 = vdwg.mxu0
    %v332 = vtanh.pop %v324
    %v333 = vtanh.pop %v329
    %vm334 = vcmask 64512
    %335 = vst.msk [vmem:[%s7] sm:$0xff] %vm334, %v332
    %336 = vst.msk [vmem:[%s7 + $0x8] sm:$0xff] %vm334, %v333
    // Predicated region
    $region34: #{tpu_custom_call.1} parent=1 // pred_check
      _
    $region35: #{tpu_custom_call.1} parent=1 // pred_check_branch
      %338 = sbr.rel (0) target = $region37
    $region36: #{tpu_custom_call.1} parent=1 // pred_region
      _
    $region37: #{tpu_custom_call.1} parent=1 // pred_fallthru
      _
    // Predicated region
    $region38: #{tpu_custom_call.1} parent=1 // pred_check
      _
    $region39: #{tpu_custom_call.1} parent=1 // pred_check_branch
      %340 = sbr.rel (0) target = $region41
    $region40: #{tpu_custom_call.1} parent=1 // pred_region
      _
    $region41: #{tpu_custom_call.1} parent=1 // pred_fallthru
      _
    %341 = vsyncpa [#allocation3], 1

</llo_original>
